<compile_context>
chip_gen: v7x
topology: tpu7x:2x2x1
jax: 0.10.0
libtpu: 0.0.40
codegen_flags: <defaults>
</compile_context>

<pallas_src>
import functools

import jax
import jax.numpy as jnp
from jax.experimental import pallas as pl
from jax.experimental.pallas import tpu as pltpu

ALPHA = 0.8
BETA = 0.2
GAMMA = 2

LANES = 128
SUBLANE_ROUND = 32   # multiple of the min sublane tile for f32(8)/bf16(16)/i8,bool(32)


def _cdiv(a, b):
    return -(-a // b)


def _round_up(a, b):
    return _cdiv(a, b) * b


def _device_config():
    """Return (tile_rows_cap, num_core_shards, use_core_parallel)."""
    kind = ""
    try:
        kind = jax.devices()[0].device_kind.lower()
    except Exception:
        pass
    if "v7" in kind:
        # 2 TensorCores/chip: split the row blocks across both cores.
        return 4096, 2, True
    if "v6" in kind or "trillium" in kind:
        return 4096, 1, False
    # v5e (16 MiB scoped VMEM default) and unknown devices: stay conservative.
    return 2048, 1, False


def _ftl_partial_kernel(x_ref, t_ref, o_ref, *, rows_total, tile_rows,
                        blocks_per_shard, num_full_blocks, has_edge):
    """Accumulate per-shard partials [sum(s*t), sum(s), sum(t)] into o_ref.

    o_ref block: (1, 3, 8, 128) f32, revisited across the inner grid axis.
    """
    c = pl.program_id(0)
    j = pl.program_id(1)

    @pl.when(j == 0)
    def _():
        o_ref[...] = jnp.zeros_like(o_ref)

    # sigmoid(x) == 0.5 * tanh(0.5 * x) + 0.5  -> exactly one EUP op / element.
    xf = x_ref[...].astype(jnp.float32)
    s = 0.5 * jnp.tanh(0.5 * xf) + 0.5
    t = t_ref[...].astype(jnp.float32)

    folds = tile_rows // 8

    def accumulate(sv, tv):
        # Leading-axis folds are plain vreg-wise VPU adds (no XLU); the single
        # cross-lane reduction happens once in the JAX wrapper.
        o_ref[0, 0] += jnp.sum((sv * tv).reshape(folds, 8, LANES), axis=0)  # TP
        o_ref[0, 1] += jnp.sum(sv.reshape(folds, 8, LANES), axis=0)         # sum(s)
        o_ref[0, 2] += jnp.sum(tv.reshape(folds, 8, LANES), axis=0)         # sum(t)

    if not has_edge:
        accumulate(s, t)
        return

    block_idx = c * blocks_per_shard + j

    def accumulate_masked():
        # Per-block scalar `remaining` (no global flat index -> no i32 overflow).
        remaining = rows_total - block_idx * tile_rows
        row = jax.lax.broadcasted_iota(jnp.int32, (tile_rows, LANES), 0)
        valid = row < remaining
        accumulate(jnp.where(valid, s, 0.0), jnp.where(valid, t, 0.0))

    if num_full_blocks == 0:
        accumulate_masked()
    else:
        is_full = block_idx < num_full_blocks

        @pl.when(is_full)
        def _():
            accumulate(s, t)

        @pl.when(jnp.logical_not(is_full))
        def _():
            accumulate_masked()


def _run_partial_sums(x2, t2, rows, tile_rows, num_shards, core_parallel):
    """pallas_call over the (rows, 128) reshaped streams; returns (S,3,8,128)."""
    total_blocks = _cdiv(rows, tile_rows)
    num_shards = max(1, min(num_shards, total_blocks))
    bps = _cdiv(total_blocks, num_shards)            # blocks per shard
    num_full_blocks = rows // tile_rows
    has_edge = (num_shards * bps * tile_rows) != rows   # partial tail block / overhang

    if num_shards * bps == total_blocks:
        def in_idx(c, j):
            return (c * bps + j, 0)
    else:
        def in_idx(c, j):
            # Overhanging shard steps re-read the last real block; the gated
            # in-kernel mask zeroes their contribution.
            return (jnp.minimum(c * bps + j, total_blocks - 1), 0)

    kernel = functools.partial(
        _ftl_partial_kernel,
        rows_total=int(rows),
        tile_rows=int(tile_rows),
        blocks_per_shard=int(bps),
        num_full_blocks=int(num_full_blocks),
        has_edge=bool(has_edge),
    )

    if core_parallel and num_shards > 1:
        semantics = (pltpu.CORE_PARALLEL, pltpu.ARBITRARY)
    else:
        semantics = (pltpu.ARBITRARY, pltpu.ARBITRARY)

    n_main = rows * LANES
    bytes_accessed = (int(x2.size) * x2.dtype.itemsize
                      + int(t2.size) * t2.dtype.itemsize
                      + num_shards * 3 * 8 * LANES * 4)

    return pl.pallas_call(
        kernel,
        out_shape=jax.ShapeDtypeStruct((num_shards, 3, 8, LANES), jnp.float32),
        grid_spec=pltpu.PrefetchScalarGridSpec(
            num_scalar_prefetch=0,
            grid=(num_shards, bps),
            in_specs=[
                pl.BlockSpec((tile_rows, LANES), in_idx),
                pl.BlockSpec((tile_rows, LANES), in_idx),
            ],
            out_specs=pl.BlockSpec((1, 3, 8, LANES), lambda c, j: (c, 0, 0, 0)),
        ),
        compiler_params=pltpu.CompilerParams(dimension_semantics=semantics),
        cost_estimate=pl.CostEstimate(
            flops=7 * n_main, transcendentals=n_main,
            bytes_accessed=int(bytes_accessed)),
    )(x2, t2)


def focal_tversky_loss(inputs, targets, smooth=1.0, alpha=ALPHA, beta=BETA,
                       gamma=GAMMA):
    """Matches FocalTverskyLoss.forward; inputs/targets stream in native dtype."""
    x = jnp.ravel(inputs)
    t = jnp.ravel(targets)          # NOTE: no wrapper-side upcast of targets
    n = x.shape[0]

    tile_cap, num_shards, core_parallel = _device_config()

    rows = n // LANES
    n_main = rows * LANES
    tail = n - n_main

    tp = jnp.float32(0.0)
    s_sum = jnp.float32(0.0)
    t_sum = jnp.float32(0.0)

    if rows > 0:
        if tail:
            # 128-aligned prefix for the kernel; the <128-element tail is
            # folded into the sums below (no full-array jnp.pad pass).
            x_main = jax.lax.slice(x, (0,), (n_main,))
            t_main = jax.lax.slice(t, (0,), (n_main,))
        else:
            x_main, t_main = x, t

        x2 = x_main.reshape(rows, LANES)
        t2 = t_main.reshape(rows, LANES)

        tile_rows = min(tile_cap, _round_up(rows, SUBLANE_ROUND))

        if core_parallel and num_shards > 1:
            try:
                partials = _run_partial_sums(x2, t2, rows, tile_rows,
                                             num_shards, True)
            except Exception:
                # Safety net: fall back to the single-shard config if
                # CORE_PARALLEL does not lower on this toolchain/chip.
                partials = _run_partial_sums(x2, t2, rows, tile_rows, 1, False)
        else:
            partials = _run_partial_sums(x2, t2, rows, tile_rows, 1, False)

        sums = jnp.sum(partials, axis=(0, 2, 3))   # (3,): TP, sum(s), sum(t)
        tp = tp + sums[0]
        s_sum = s_sum + sums[1]
        t_sum = t_sum + sums[2]

    if tail:
        # <128 leftover elements: negligible, computed directly in JAX.
        x_t = jax.lax.slice(x, (n_main,), (n,)).astype(jnp.float32)
        t_t = jax.lax.slice(t, (n_main,), (n,)).astype(jnp.float32)
        s_t = jax.nn.sigmoid(x_t)
        tp = tp + jnp.sum(s_t * t_t)
        s_sum = s_sum + jnp.sum(s_t)
        t_sum = t_sum + jnp.sum(t_t)

    fp = s_sum - tp            # sum((1 - t) * s) = sum(s) - TP
    fn = t_sum - tp            # sum(t * (1 - s)) = sum(t) - TP
    tversky = (tp + smooth) / (tp + alpha * fp + beta * fn + smooth)
    return (1.0 - tversky) ** gamma


def _reference(inputs, targets, smooth=1.0, alpha=ALPHA, beta=BETA,
               gamma=GAMMA):
    s = jax.nn.sigmoid(inputs.astype(jnp.float32)).ravel()
    t = targets.astype(jnp.float32).ravel()
    TP = jnp.sum(s * t)
    FP = jnp.sum((1.0 - t) * s)
    FN = jnp.sum(t * (1.0 - s))
    tversky = (TP + smooth) / (TP + alpha * FP + beta * FN + smooth)
    return (1.0 - tversky) ** gamma


if __name__ == "__main__":
    key = jax.random.PRNGKey(0)
    k1, k2, k3, k4 = jax.random.split(key, 4)

    # NCHW logits + binary targets (the module flattens them anyway).
    x = jax.random.normal(k1, (2, 4, 16, 16), dtype=jnp.float32)
    tgt = (jax.random.uniform(k2, (2, 4, 16, 16)) > 0.5).astype(jnp.float32)
    loss = focal_tversky_loss(x, tgt)
    jax.block_until_ready(loss)
    ref = _reference(x, tgt)
    assert jnp.allclose(loss, ref, rtol=1e-5, atol=1e-6), (loss, ref)

    # Flattened size NOT a multiple of 128: exercises the no-pad prefix path,
    # the wrapper-side tail fold and the gated in-kernel mask.
    x_odd = jax.random.normal(k3, (2, 4, 15, 15), dtype=jnp.float32)
    t_odd = (jax.random.uniform(k4, (2, 4, 15, 15)) > 0.5).astype(jnp.float32)
    loss_odd = focal_tversky_loss(x_odd, t_odd)
    jax.block_until_ready(loss_odd)
    ref_odd = _reference(x_odd, t_odd)
    assert jnp.allclose(loss_odd, ref_odd, rtol=1e-5, atol=1e-6), (loss_odd, ref_odd)

    # bf16 logits stream straight through the kernel (halved HBM traffic for
    # the logit stream); the f32 upcast happens in-kernel.
    x_bf16 = x.astype(jnp.bfloat16)
    loss_bf16 = focal_tversky_loss(x_bf16, tgt)
    jax.block_until_ready(loss_bf16)
    ref_bf16 = _reference(x_bf16, tgt)
    assert jnp.allclose(loss_bf16, ref_bf16, rtol=1e-4, atol=1e-5), (loss_bf16, ref_bf16)

    print("KERNEL_OK")
</pallas_src>

<mosaic_0001>
module attributes {stable_mosaic.version = 11 : i64} {
  func.func @_ftl_partial_kernel(%arg0: i32, %arg1: i32, %arg2: memref<32x128xf32, #tpu.memory_space<vmem>>, %arg3: memref<32x128xf32, #tpu.memory_space<vmem>>, %arg4: memref<1x3x8x128xf32, #tpu.memory_space<vmem>>) attributes {dimension_semantics = [#tpu.dimension_semantics<arbitrary>, #tpu.dimension_semantics<arbitrary>], iteration_bounds = array<i64: 1, 1>, scalar_prefetch = 0 : i64, scratch_operands = 0 : i64, tpu.core_type = #tpu.core_type<tc>, window_params = [{transform_indices = @transform_0, window_bounds = array<i64: 32, 128>}, {transform_indices = @transform_1, window_bounds = array<i64: 32, 128>}, {transform_indices = @transform_2, window_bounds = array<i64: 1, 3, 8, 128>}]} {
    %c0_i32 = arith.constant 0 : i32
    %0 = arith.cmpi eq, %arg1, %c0_i32 : i32
    %1 = arith.extui %0 : i1 to i32
    %c0_i32_0 = arith.constant 0 : i32
    %2 = arith.cmpi ne, %1, %c0_i32_0 : i32
    scf.if %2 {
      %cst_33 = arith.constant 0.000000e+00 : f32
      %48 = vector.broadcast %cst_33 : f32 to vector<1x3x8x128xf32>
      %c0_34 = arith.constant 0 : index
      %c0_35 = arith.constant 0 : index
      %c0_36 = arith.constant 0 : index
      %c0_37 = arith.constant 0 : index
      %49 = vector.load %arg4[%c0_34, %c0_35, %c0_36, %c0_37] : memref<1x3x8x128xf32, #tpu.memory_space<vmem>>, vector<1x3x8x128xf32>
      tpu.vector_store %arg4[%c0_34, %c0_35, %c0_36, %c0_37], %48 {strides = array<i32>} : memref<1x3x8x128xf32, #tpu.memory_space<vmem>>, vector<1x3x8x128xf32>,
    } else {
    }
    %c0 = arith.constant 0 : index
    %c0_1 = arith.constant 0 : index
    %3 = vector.load %arg2[%c0, %c0_1] : memref<32x128xf32, #tpu.memory_space<vmem>>, vector<32x128xf32>
    %cst = arith.constant 5.000000e-01 : f32
    %4 = vector.broadcast %cst : f32 to vector<32x128xf32>
    %5 = arith.mulf %4, %3 : vector<32x128xf32>
    %6 = math.tanh %5 : vector<32x128xf32>
    %cst_2 = arith.constant 5.000000e-01 : f32
    %7 = vector.broadcast %cst_2 : f32 to vector<32x128xf32>
    %8 = arith.mulf %7, %6 : vector<32x128xf32>
    %cst_3 = arith.constant 5.000000e-01 : f32
    %9 = vector.broadcast %cst_3 : f32 to vector<32x128xf32>
    %10 = arith.addf %8, %9 : vector<32x128xf32>
    %c0_4 = arith.constant 0 : index
    %c0_5 = arith.constant 0 : index
    %11 = vector.load %arg3[%c0_4, %c0_5] : memref<32x128xf32, #tpu.memory_space<vmem>>, vector<32x128xf32>
    %c1_i32 = arith.constant 1 : i32
    %12 = arith.muli %arg0, %c1_i32 : i32
    %13 = arith.addi %12, %arg1 : i32
    %c32_i32 = arith.constant 32 : i32
    %14 = arith.muli %13, %c32_i32 : i32
    %c16_i32 = arith.constant 16 : i32
    %15 = arith.subi %c16_i32, %14 : i32
    %16 = tpu.iota {dimensions = array<i32: 0>} : vector<32x128xi32>
    %17 = vector.broadcast %15 : i32 to vector<32x128xi32>
    %18 = arith.cmpi slt, %16, %17 : vector<32x128xi32>
    %cst_6 = arith.constant 0.000000e+00 : f32
    %19 = vector.broadcast %cst_6 : f32 to vector<32x128xf32>
    %20 = arith.select %18, %10, %19 : vector<32x128xi1>, vector<32x128xf32>
    %cst_7 = arith.constant 0.000000e+00 : f32
    %21 = vector.broadcast %cst_7 : f32 to vector<32x128xf32>
    %22 = arith.select %18, %11, %21 : vector<32x128xi1>, vector<32x128xf32>
    %c0_8 = arith.constant 0 : index
    %c0_9 = arith.constant 0 : index
    %c0_10 = arith.constant 0 : index
    %c0_11 = arith.constant 0 : index
    %23 = vector.load %arg4[%c0_8, %c0_9, %c0_10, %c0_11] : memref<1x3x8x128xf32, #tpu.memory_space<vmem>>, vector<1x1x8x128xf32>
    %24 = vector.shape_cast %23 : vector<1x1x8x128xf32> to vector<8x128xf32>
    %25 = arith.mulf %20, %22 : vector<32x128xf32>
    %26 = vector.shape_cast %25 : vector<32x128xf32> to vector<4x8x128xf32>
    %cst_12 = arith.constant dense<0.000000e+00> : vector<8x128xf32>
    %27 = vector.multi_reduction <add>, %26, %cst_12 [0] : vector<4x8x128xf32> to vector<8x128xf32>
    %28 = arith.addf %24, %27 : vector<8x128xf32>
    %c0_13 = arith.constant 0 : index
    %c0_14 = arith.constant 0 : index
    %c0_15 = arith.constant 0 : index
    %c0_16 = arith.constant 0 : index
    %29 = vector.load %arg4[%c0_13, %c0_14, %c0_15, %c0_16] : memref<1x3x8x128xf32, #tpu.memory_space<vmem>>, vector<1x1x8x128xf32>
    %30 = vector.shape_cast %29 : vector<1x1x8x128xf32> to vector<8x128xf32>
    %31 = vector.shape_cast %28 : vector<8x128xf32> to vector<1x1x8x128xf32>
    tpu.vector_store %arg4[%c0_13, %c0_14, %c0_15, %c0_16], %31 {strides = array<i32>} : memref<1x3x8x128xf32, #tpu.memory_space<vmem>>, vector<1x1x8x128xf32>,
    %c0_17 = arith.constant 0 : index
    %c1 = arith.constant 1 : index
    %c0_18 = arith.constant 0 : index
    %c0_19 = arith.constant 0 : index
    %32 = vector.load %arg4[%c0_17, %c1, %c0_18, %c0_19] : memref<1x3x8x128xf32, #tpu.memory_space<vmem>>, vector<1x1x8x128xf32>
    %33 = vector.shape_cast %32 : vector<1x1x8x128xf32> to vector<8x128xf32>
    %34 = vector.shape_cast %20 : vector<32x128xf32> to vector<4x8x128xf32>
    %cst_20 = arith.constant dense<0.000000e+00> : vector<8x128xf32>
    %35 = vector.multi_reduction <add>, %34, %cst_20 [0] : vector<4x8x128xf32> to vector<8x128xf32>
    %36 = arith.addf %33, %35 : vector<8x128xf32>
    %c0_21 = arith.constant 0 : index
    %c1_22 = arith.constant 1 : index
    %c0_23 = arith.constant 0 : index
    %c0_24 = arith.constant 0 : index
    %37 = vector.load %arg4[%c0_21, %c1_22, %c0_23, %c0_24] : memref<1x3x8x128xf32, #tpu.memory_space<vmem>>, vector<1x1x8x128xf32>
    %38 = vector.shape_cast %37 : vector<1x1x8x128xf32> to vector<8x128xf32>
    %39 = vector.shape_cast %36 : vector<8x128xf32> to vector<1x1x8x128xf32>
    tpu.vector_store %arg4[%c0_21, %c1_22, %c0_23, %c0_24], %39 {strides = array<i32>} : memref<1x3x8x128xf32, #tpu.memory_space<vmem>>, vector<1x1x8x128xf32>,
    %c0_25 = arith.constant 0 : index
    %c2 = arith.constant 2 : index
    %c0_26 = arith.constant 0 : index
    %c0_27 = arith.constant 0 : index
    %40 = vector.load %arg4[%c0_25, %c2, %c0_26, %c0_27] : memref<1x3x8x128xf32, #tpu.memory_space<vmem>>, vector<1x1x8x128xf32>
    %41 = vector.shape_cast %40 : vector<1x1x8x128xf32> to vector<8x128xf32>
    %42 = vector.shape_cast %22 : vector<32x128xf32> to vector<4x8x128xf32>
    %cst_28 = arith.constant dense<0.000000e+00> : vector<8x128xf32>
    %43 = vector.multi_reduction <add>, %42, %cst_28 [0] : vector<4x8x128xf32> to vector<8x128xf32>
    %44 = arith.addf %41, %43 : vector<8x128xf32>
    %c0_29 = arith.constant 0 : index
    %c2_30 = arith.constant 2 : index
    %c0_31 = arith.constant 0 : index
    %c0_32 = arith.constant 0 : index
    %45 = vector.load %arg4[%c0_29, %c2_30, %c0_31, %c0_32] : memref<1x3x8x128xf32, #tpu.memory_space<vmem>>, vector<1x1x8x128xf32>
    %46 = vector.shape_cast %45 : vector<1x1x8x128xf32> to vector<8x128xf32>
    %47 = vector.shape_cast %44 : vector<8x128xf32> to vector<1x1x8x128xf32>
    tpu.vector_store %arg4[%c0_29, %c2_30, %c0_31, %c0_32], %47 {strides = array<i32>} : memref<1x3x8x128xf32, #tpu.memory_space<vmem>>, vector<1x1x8x128xf32>,
    return
  }
  func.func @transform_0(%arg0: i32, %arg1: i32) -> (i32, i32) {
    %c1_i32 = arith.constant 1 : i32
    %0 = arith.muli %arg0, %c1_i32 : i32
    %1 = arith.addi %0, %arg1 : i32
    %c0_i32 = arith.constant 0 : i32
    %c0_i32_0 = arith.constant 0 : i32
    return %1, %c0_i32 : i32, i32
  }
  func.func @transform_1(%arg0: i32, %arg1: i32) -> (i32, i32) {
    %c1_i32 = arith.constant 1 : i32
    %0 = arith.muli %arg0, %c1_i32 : i32
    %1 = arith.addi %0, %arg1 : i32
    %c0_i32 = arith.constant 0 : i32
    %c0_i32_0 = arith.constant 0 : i32
    return %1, %c0_i32 : i32, i32
  }
  func.func @transform_2(%arg0: i32, %arg1: i32) -> (i32, i32, i32, i32) {
    %c0_i32 = arith.constant 0 : i32
    %c0_i32_0 = arith.constant 0 : i32
    %c0_i32_1 = arith.constant 0 : i32
    %c0_i32_2 = arith.constant 0 : i32
    return %arg0, %c0_i32, %c0_i32_0, %c0_i32_1 : i32, i32, i32, i32
  }
}

</mosaic_0001>

<llo_original>
// kernel: tpu_custom_call.1
$region0: #{tpu_custom_call.1}
  #allocation0 [shape = 'u32[]', space=smem, size = 0x4, offset = 0x4, fixed_abs, tag = 'smem constant byte address 0x4 - core index']
  #allocation1 [shape = 'u32[144,128]{1,0:T(1,128)}', space=vmem, size = 0x12000, scoped, tag = 'internal scratch']
  %s0 = inlined_call_operand.hbm [shape: f32[16,128], index: 0, kind: input, shape index: {}]
  %s1 = inlined_call_operand.hbm [shape: f32[16,128], index: 1, kind: input, shape index: {}]
  %s2 = inlined_call_operand.hbm [shape: f32[1,3,8,128], index: 2, kind: output, shape index: {}]
  %s3 = sld [smem:[#allocation0]]
  $region30: #{tpu_custom_call.1} parent=0
    _
  %s5 = ssub.s32 1, %s3
  %s6 = scalar_select 0, %s5, %s3
  $region1: #{tpu_custom_call.1} parent=0
    #allocation2 [shape = 'u8[16384]{0}', space=vmem, size = 0x4000, scoped, tag = 'input window, operand 0, single buffered']
    #allocation3 [shape = 's32[1]{0}', space=sflag, size = 0x4, scoped, tag = 'scoped memory for tpu_custom_call.1']
    #allocation4 [shape = 's32[1]{0}', space=sflag, size = 0x4, scoped, tag = 'scoped memory for tpu_custom_call.1']
    #allocation5 [shape = 'u8[16384]{0}', space=vmem, size = 0x4000, scoped, tag = 'input window, operand 1, single buffered']
    #allocation6 [shape = 's32[1]{0}', space=sflag, size = 0x4, scoped, tag = 'scoped memory for tpu_custom_call.1']
    #allocation7 [shape = 'u8[12288]{0}', space=vmem, size = 0x3000, scoped, tag = 'output window, operand 0, single buffered']
    %7 = vsyncpa [#allocation3], 0
    %8 = vsyncpa [#allocation6], 0
    %9 = vsyncpa [#allocation4], 0
    // Predicated region
    $region2: #{tpu_custom_call.1} parent=1 // pred_check
      _
    $region3: #{tpu_custom_call.1} parent=1 // pred_check_branch
      %11 = sbr.rel (0) target = $region5
    $region4: #{tpu_custom_call.1} parent=1 // pred_region
      %s12 = sadd.s32 0, 0
      %s13 = smul.u32 4, %s12
      %s14 = ssub.s32 2, %s13
      %s15 = smul.u32 128, %s14
      %s17 = ssub.s32 512, %s15
      %18 = vsyncadd [#allocation3], %s17
      %p19 = scmp.ne.s32.totalorder 0, %s15
      %s20 = smul.addr %s13, 128
      %s21 = scalar_lea.hbm %s0, %s20
      %s22 = smul.u32 8, %s14
      %s23 = sshll.u32 [#allocation2], 4
      %s24 = int_to_ptr.vmem [resolvable:$true] %s23
      %s25 = sshll.u32 %s22, 4
      %29 = dma.hbm_to_vmem [thread:$0]  (%p19), %s21, %s25, %s24, [#allocation3], 128, 128, 8
    $region5: #{tpu_custom_call.1} parent=1 // pred_fallthru
      _
    // Predicated region
    $region6: #{tpu_custom_call.1} parent=1 // pred_check
      _
    $region7: #{tpu_custom_call.1} parent=1 // pred_check_branch
      %31 = sbr.rel (0) target = $region9
    $region8: #{tpu_custom_call.1} parent=1 // pred_region
      %s32 = sadd.s32 0, 0
      %s33 = smul.u32 4, %s32
      %s34 = ssub.s32 2, %s33
      %s35 = smul.u32 128, %s34
      %s37 = ssub.s32 512, %s35
      %38 = vsyncadd [#allocation6], %s37
      %p39 = scmp.ne.s32.totalorder 0, %s35
      %s40 = smul.addr %s33, 128
      %s41 = scalar_lea.hbm %s1, %s40
      %s42 = smul.u32 8, %s34
      %s43 = sshll.u32 [#allocation5], 4
      %s44 = int_to_ptr.vmem [resolvable:$true] %s43
      %s45 = sshll.u32 %s42, 4
      %49 = dma.hbm_to_vmem [thread:$0]  (%p39), %s41, %s45, %s44, [#allocation6], 128, 128, 8
    $region9: #{tpu_custom_call.1} parent=1 // pred_fallthru
      _
    // Predicated region
    $region10: #{tpu_custom_call.1} parent=1 // pred_check
      _
    $region11: #{tpu_custom_call.1} parent=1 // pred_check_branch
      %51 = sbr.rel (0) target = $region13
    $region12: #{tpu_custom_call.1} parent=1 // pred_region
      %52 = dma.done [#allocation3], 512
    $region13: #{tpu_custom_call.1} parent=1 // pred_fallthru
      _
    // Predicated region
    $region14: #{tpu_custom_call.1} parent=1 // pred_check
      _
    $region15: #{tpu_custom_call.1} parent=1 // pred_check_branch
      %54 = sbr.rel (0) target = $region17
    $region16: #{tpu_custom_call.1} parent=1 // pred_region
      %55 = dma.done [#allocation6], 512
    $region17: #{tpu_custom_call.1} parent=1 // pred_fallthru
      _
    %s56 = sadd.s32 0, 0
    %s57 = smul.u32 4, %s56
    %s58 = ssub.s32 2, %s57
    %s59 = smul.u32 128, %s58
    %s60 = sadd.s32 0, 0
    %s61 = smul.u32 4, %s60
    %s62 = ssub.s32 2, %s61
    %s63 = smul.u32 128, %s62
    %p64 = scmp.eq.s32.totalorder 0, 0
    // Predicated region
    $region18: #{tpu_custom_call.1} parent=1 // pred_check
      %p65 = pneg %p64
    $region19: #{tpu_custom_call.1} parent=1 // pred_check_branch
      %67 = sbr.rel (%p65) target = $region21
    $region20: #{tpu_custom_call.1} parent=1 // pred_region
      %68 = vst [vmem:[#allocation7] sm:$0xff] 0.0
      %69 = vst [vmem:[#allocation7 + $0x8] sm:$0xff] 0.0
      %70 = vst [vmem:[#allocation7 + $0x10] sm:$0xff] 0.0
    $region21: #{tpu_custom_call.1} parent=1 // pred_fallthru
      _
    %v71 = vld [vmem:[#allocation2] sm:$0xff]
    %v72 = vld [vmem:[#allocation2 + $0x8] sm:$0xff]
    %v73 = vld [vmem:[#allocation2 + $0x10] sm:$0xff]
    %v74 = vld [vmem:[#allocation2 + $0x18] sm:$0xff]
    %v75 = vmul.f32 %v71, 0.5
    %v76 = vmul.f32 %v72, 0.5
    %v77 = vmul.f32 %v73, 0.5
    %v78 = vmul.f32 %v74, 0.5
    %v79 = vtanh.pop %v75
    %v80 = vtanh.pop %v76
    %v81 = vtanh.pop %v77
    %v82 = vtanh.pop %v78
    %v83 = vmul.f32 %v79, 0.5
    %v84 = vmul.f32 %v80, 0.5
    %v85 = vmul.f32 %v81, 0.5
    %v86 = vmul.f32 %v82, 0.5
    %v87 = vadd.f32 %v83, 0.5
    %v88 = vadd.f32 %v84, 0.5
    %v89 = vadd.f32 %v85, 0.5
    %v90 = vadd.f32 %v86, 0.5
    %v91 = vld [vmem:[#allocation5] sm:$0xff]
    %v92 = vld [vmem:[#allocation5 + $0x8] sm:$0xff]
    %v93 = vld [vmem:[#allocation5 + $0x10] sm:$0xff]
    %v94 = vld [vmem:[#allocation5 + $0x18] sm:$0xff]
    %s95 = sadd.s32 0, 0
    %s96 = smul.u32 %s95, 32
    %s97 = ssub.s32 16, %s96
    %v98 = vlaneseq
    %v99 = vshrl.u32 %v98, 7
    %v100 = vadd.s32 %v99, 8
    %v101 = vadd.s32 %v99, 16
    %v102 = vadd.s32 %v99, 24
    %v103 = vstv %s97
    %vm104 = vcmp.lt.s32.totalorder %v99, %v103
    %vm105 = vcmp.lt.s32.totalorder %v100, %v103
    %vm106 = vcmp.lt.s32.totalorder %v101, %v103
    %vm107 = vcmp.lt.s32.totalorder %v102, %v103
    %v108 = vsel %vm104, %v87, 0.0
    %v109 = vsel %vm105, %v88, 0.0
    %v110 = vsel %vm106, %v89, 0.0
    %v111 = vsel %vm107, %v90, 0.0
    %v112 = vsel %vm104, %v91, 0.0
    %v113 = vsel %vm105, %v92, 0.0
    %v114 = vsel %vm106, %v93, 0.0
    %v115 = vsel %vm107, %v94, 0.0
    %v116 = vld [vmem:[#allocation7] sm:$0xff]
    %v117 = vmul.f32 %v108, %v112
    %v118 = vmul.f32 %v109, %v113
    %v119 = vmul.f32 %v110, %v114
    %v120 = vmul.f32 %v111, %v115
    %v121 = vadd.f32 %v117, %v118
    %v122 = vadd.f32 %v121, %v119
    %v123 = vadd.f32 %v122, %v120
    %v124 = vadd.f32 %v116, %v123
    %125 = vst [vmem:[#allocation7] sm:$0xff] %v124
    %s126 = scalar_lea.vmem [#allocation7], 8
    %v127 = vld [vmem:[%s126] sm:$0xff]
    %v128 = vadd.f32 %v108, %v109
    %v129 = vadd.f32 %v128, %v110
    %v130 = vadd.f32 %v129, %v111
    %v131 = vadd.f32 %v127, %v130
    %132 = vst [vmem:[%s126] sm:$0xff] %v131
    %s133 = scalar_lea.vmem [#allocation7], 16
    %v134 = vld [vmem:[%s133] sm:$0xff]
    %v135 = vadd.f32 %v112, %v113
    %v136 = vadd.f32 %v135, %v114
    %v137 = vadd.f32 %v136, %v115
    %v138 = vadd.f32 %v134, %v137
    %139 = vst [vmem:[%s133] sm:$0xff] %v138
    // Predicated region
    $region22: #{tpu_custom_call.1} parent=1 // pred_check
      _
    $region23: #{tpu_custom_call.1} parent=1 // pred_check_branch
      %141 = sbr.rel (0) target = $region25
    $region24: #{tpu_custom_call.1} parent=1 // pred_region
      %s143 = ssub.s32 384, 384
      %144 = vsyncadd [#allocation4], %s143
      %s145 = sshll.u32 [#allocation7], 4
      %s146 = int_to_ptr.vmem [resolvable:$true] %s145
      %151 = dma.vmem_to_hbm [thread:$0]  %s146, 384, %s2, [#allocation4], 128, 128, 8
    $region25: #{tpu_custom_call.1} parent=1 // pred_fallthru
      _
    // Predicated region
    $region26: #{tpu_custom_call.1} parent=1 // pred_check
      _
    $region27: #{tpu_custom_call.1} parent=1 // pred_check_branch
      %153 = sbr.rel (0) target = $region29
    $region28: #{tpu_custom_call.1} parent=1 // pred_region
      %154 = dma.done [#allocation4], 384
    $region29: #{tpu_custom_call.1} parent=1 // pred_fallthru
      _
    %155 = vsyncpa [#allocation3], 1
    %156 = vsyncpa [#allocation6], 1
    %157 = vsyncpa [#allocation4], 1

</llo_original>
